<compile_context>
chip_gen: v5e
topology: v5e:2x2
jax: 0.10.0
libtpu: 0.0.40
codegen_flags: <defaults>
</compile_context>

<pallas_src>
import functools
import math

import jax
import jax.numpy as jnp
from jax.experimental import pallas as pl
from jax.experimental.pallas import tpu as pltpu


def _bessel_kernel(x_ref, w_ref, o_ref, *, r_max: float):
    # x_ref: (1, TILE_N)          edge lengths, lane-dense
    # w_ref: (NUM_BASIS, 1)       resident basis frequencies
    # o_ref: (NUM_BASIS, TILE_N)  transposed output block, lane-dense stores
    x = x_ref[...]                                   # (1, tn)  f32
    w = w_ref[...]                                   # (nb, 1)  f32
    # O(N) divide: EUP approx reciprocal + one Newton-Raphson refinement step.
    inv_x = pl.reciprocal(x, approx=True)
    inv_x = inv_x * (2.0 - x * inv_x)
    scale = (2.0 / r_max) * inv_x                    # (1, tn)
    xs = x * (1.0 / r_max)                           # (1, tn)
    # Broadcast (nb,1)*(1,tn) -> (nb,tn): one mul per output element + sin + scale.
    o_ref[...] = (jnp.sin(w * xs) * scale).astype(o_ref.dtype)


def _choose_tiling(n: int, max_tile_n: int, min_split_tile_n: int = 4096):
    """Balanced, lane-aligned tiling; >=2 even grid steps when tiles stay big."""
    blocks = pl.cdiv(n, 128)            # 128-lane blocks needed to cover N
    n_min = blocks * 128
    num_tiles = pl.cdiv(n_min, max_tile_n)
    # v7x has 2 TensorCores; give the "parallel" grid axis >= 2 (even) steps whenever each
    # tile keeps >= min_split_tile_n lanes.  Harmless on single-core v5e/v6e.
    if num_tiles == 1 and n_min >= 2 * min_split_tile_n:
        num_tiles = 2
    elif num_tiles > 1 and num_tiles % 2 == 1 and n_min >= (num_tiles + 1) * min_split_tile_n:
        num_tiles += 1
    tile_n = pl.cdiv(blocks, num_tiles) * 128
    num_tiles = pl.cdiv(n_min, tile_n)  # recompute after rounding tile_n up to 128
    n_pad = num_tiles * tile_n
    return tile_n, n_pad, num_tiles


def bessel_basis(x: jax.Array, bessel_weights: jax.Array, r_max: float, *,
                 max_tile_n: int = 65536,
                 transpose_output: bool = True,
                 out_dtype=jnp.float32) -> jax.Array:
    """x: [N] float, bessel_weights: [num_basis] float.

    Returns [N, num_basis] (PyTorch convention) if transpose_output, else the
    lane-dense [num_basis, N] layout (skips one full HBM pass over the result).
    """
    n = x.shape[0]
    num_basis = bessel_weights.shape[0]

    tile_n, n_pad, num_tiles = _choose_tiling(n, max_tile_n)

    x_f32 = x.astype(jnp.float32)
    if n_pad == n:
        x2 = x_f32.reshape(1, n_pad)                         # no pad copy needed
    else:
        # Pad with 1.0 so 1/x never produces inf in the (discarded) tail.
        x2 = jnp.pad(x_f32, (0, n_pad - n), constant_values=1.0).reshape(1, n_pad)
    w2 = bessel_weights.astype(jnp.float32).reshape(num_basis, 1)

    kernel = functools.partial(_bessel_kernel, r_max=float(r_max))

    out_t = pl.pallas_call(
        kernel,
        out_shape=jax.ShapeDtypeStruct((num_basis, n_pad), out_dtype),
        grid_spec=pltpu.PrefetchScalarGridSpec(
            num_scalar_prefetch=0,
            grid=(num_tiles,),
            in_specs=[
                # x: lane-dense row, new block each grid step.
                pl.BlockSpec((1, tile_n), lambda i: (0, i)),
                # weights: constant index_map -> resident in VMEM, no re-DMA.
                pl.BlockSpec((num_basis, 1), lambda i: (0, 0)),
            ],
            out_specs=pl.BlockSpec((num_basis, tile_n), lambda i: (0, i)),
        ),
        compiler_params=pltpu.CompilerParams(
            dimension_semantics=("parallel",)),
    )(x2, w2)

    if transpose_output:
        # PyTorch convention [N, num_basis]; XLA typically fuses this transpose into the
        # consumer — pass transpose_output=False to avoid it entirely.
        return out_t.T[:n]
    return out_t[:, :n]


def bessel_basis_ref(x, bessel_weights, r_max):
    prefactor = 2.0 / r_max
    numerator = jnp.sin(bessel_weights * x[..., None] / r_max)
    return prefactor * (numerator / x[..., None])


if __name__ == "__main__":
    key = jax.random.PRNGKey(0)
    r_max = 5.0
    num_basis = 8

    # Deterministic parameter init, identical to the PyTorch __init__:
    bessel_weights = jnp.linspace(1.0, float(num_basis), num_basis,
                                  dtype=jnp.float32) * math.pi

    # Case 1: small N, NOT a multiple of 128 (single tile + padded tail).
    n1 = 300
    k1, k2 = jax.random.split(key)
    x1 = jax.random.uniform(k1, (n1,), dtype=jnp.float32, minval=0.1, maxval=r_max)
    out1 = jax.block_until_ready(bessel_basis(x1, bessel_weights, r_max))
    ref1 = bessel_basis_ref(x1, bessel_weights, r_max)
    assert out1.shape == (n1, num_basis)
    assert jnp.allclose(out1, ref1, atol=1e-5, rtol=1e-5), "mismatch (case 1)"

    # Case 2: multi-tile path (small max_tile_n forces a 3-step grid) with a ragged tail.
    n2 = 1337
    x2 = jax.random.uniform(k2, (n2,), dtype=jnp.float32, minval=0.1, maxval=r_max)
    out2 = jax.block_until_ready(bessel_basis(x2, bessel_weights, r_max, max_tile_n=512))
    ref2 = bessel_basis_ref(x2, bessel_weights, r_max)
    assert out2.shape == (n2, num_basis)
    assert jnp.allclose(out2, ref2, atol=1e-5, rtol=1e-5), "mismatch (case 2, multi-tile)"

    # Case 3: lane-dense [num_basis, N] output layout (no wrapper transpose).
    out3 = jax.block_until_ready(
        bessel_basis(x2, bessel_weights, r_max, max_tile_n=512, transpose_output=False))
    assert out3.shape == (num_basis, n2)
    assert jnp.allclose(out3, ref2.T, atol=1e-5, rtol=1e-5), "mismatch (case 3, kn layout)"

    print("KERNEL_OK")
</pallas_src>

<mosaic_0001>
module attributes {stable_mosaic.version = 11 : i64} {
  func.func @_bessel_kernel(%arg0: i32, %arg1: memref<1x384xf32, #tpu.memory_space<vmem>>, %arg2: memref<8x1xf32, #tpu.memory_space<vmem>>, %arg3: memref<8x384xf32, #tpu.memory_space<vmem>>) attributes {dimension_semantics = [#tpu.dimension_semantics<parallel>], iteration_bounds = array<i64: 1>, scalar_prefetch = 0 : i64, scratch_operands = 0 : i64, tpu.core_type = #tpu.core_type<tc>, window_params = [{transform_indices = @transform_0, window_bounds = array<i64: 1, 384>}, {pipeline_mode = #tpu.pipeline_mode<synchronous>, transform_indices = @transform_1, window_bounds = array<i64: 8, 1>}, {transform_indices = @transform_2, window_bounds = array<i64: 8, 384>}]} {
    %c0 = arith.constant 0 : index
    %c0_0 = arith.constant 0 : index
    %0 = vector.load %arg1[%c0, %c0_0] : memref<1x384xf32, #tpu.memory_space<vmem>>, vector<1x384xf32>
    %c0_1 = arith.constant 0 : index
    %c0_2 = arith.constant 0 : index
    %1 = vector.load %arg2[%c0_1, %c0_2] : memref<8x1xf32, #tpu.memory_space<vmem>>, vector<8x1xf32>
    %2 = tpu.reciprocal %0 {approx = true} : vector<1x384xf32> -> vector<1x384xf32>
    %3 = arith.mulf %0, %2 : vector<1x384xf32>
    %cst = arith.constant 2.000000e+00 : f32
    %4 = vector.broadcast %cst : f32 to vector<1x384xf32>
    %5 = arith.subf %4, %3 : vector<1x384xf32>
    %6 = arith.mulf %2, %5 : vector<1x384xf32>
    %cst_3 = arith.constant 4.000000e-01 : f32
    %7 = vector.broadcast %cst_3 : f32 to vector<1x384xf32>
    %8 = arith.mulf %7, %6 : vector<1x384xf32>
    %cst_4 = arith.constant 2.000000e-01 : f32
    %9 = vector.broadcast %cst_4 : f32 to vector<1x384xf32>
    %10 = arith.mulf %0, %9 : vector<1x384xf32>
    %11 = vector.broadcast %1 : vector<8x1xf32> to vector<8x384xf32>
    %12 = vector.broadcast %10 : vector<1x384xf32> to vector<8x384xf32>
    %13 = arith.mulf %11, %12 : vector<8x384xf32>
    %14 = math.sin %13 : vector<8x384xf32>
    %15 = vector.broadcast %8 : vector<1x384xf32> to vector<8x384xf32>
    %16 = arith.mulf %14, %15 : vector<8x384xf32>
    %c0_5 = arith.constant 0 : index
    %c0_6 = arith.constant 0 : index
    %17 = vector.load %arg3[%c0_5, %c0_6] : memref<8x384xf32, #tpu.memory_space<vmem>>, vector<8x384xf32>
    tpu.vector_store %arg3[%c0_5, %c0_6], %16 {strides = array<i32>} : memref<8x384xf32, #tpu.memory_space<vmem>>, vector<8x384xf32>,
    return
  }
  func.func @transform_0(%arg0: i32) -> (i32, i32) {
    %c0_i32 = arith.constant 0 : i32
    %c0_i32_0 = arith.constant 0 : i32
    return %c0_i32, %arg0 : i32, i32
  }
  func.func @transform_1(%arg0: i32) -> (i32, i32) {
    %c0_i32 = arith.constant 0 : i32
    %c0_i32_0 = arith.constant 0 : i32
    %c0_i32_1 = arith.constant 0 : i32
    return %c0_i32, %c0_i32_0 : i32, i32
  }
  func.func @transform_2(%arg0: i32) -> (i32, i32) {
    %c0_i32 = arith.constant 0 : i32
    %c0_i32_0 = arith.constant 0 : i32
    return %c0_i32, %arg0 : i32, i32
  }
}

</mosaic_0001>

<llo_original>
// kernel: tpu_custom_call.1
$region0: #{tpu_custom_call.1}
  #allocation0 [shape = 'u32[]', space=smem, size = 0x4, offset = 0x4, fixed_abs, tag = 'smem constant byte address 0x4 - core index']
  #allocation1 [shape = 'u32[72,128]{1,0:T(1,128)}', space=vmem, size = 0x9000, scoped, tag = 'internal scratch']
  %s0 = inlined_call_operand.vmem [shape: f32[1,384], index: 0, kind: input, shape index: {}]
  %s1 = inlined_call_operand.vmem [shape: f32[8,1], index: 1, kind: input, shape index: {}]
  %s2 = inlined_call_operand.hbm [shape: f32[8,384], index: 2, kind: output, shape index: {}]
  %s3 = sld [smem:[#allocation0]]
  $region18: #{tpu_custom_call.1} parent=0
    _
  %s5 = ssub.s32 1, %s3
  %s6 = scalar_select 0, %s5, %s3
  $region1: #{tpu_custom_call.1} parent=0
    #allocation2 [shape = 'u8[12288]{0}', space=vmem, size = 0x3000, scoped, tag = 'output window, operand 0, single buffered']
    #allocation3 [shape = 's32[1]{0}', space=sflag, size = 0x4, scoped, tag = 'scoped memory for tpu_custom_call.1']
    %7 = vsyncpa [#allocation3], 0
    // Predicated region
    $region2: #{tpu_custom_call.1} parent=1 // pred_check
      _
    $region3: #{tpu_custom_call.1} parent=1 // pred_check_branch
      %9 = sbr.rel (0) target = $region5
    $region4: #{tpu_custom_call.1} parent=1 // pred_region
      _
    $region5: #{tpu_custom_call.1} parent=1 // pred_fallthru
      _
    // Predicated region
    $region6: #{tpu_custom_call.1} parent=1 // pred_check
      _
    $region7: #{tpu_custom_call.1} parent=1 // pred_check_branch
      %11 = sbr.rel (0) target = $region9
    $region8: #{tpu_custom_call.1} parent=1 // pred_region
      _
    $region9: #{tpu_custom_call.1} parent=1 // pred_fallthru
      _
    %v12 = vld [vmem:[%s0] sm:$0x7]
    %v13 = vld [vmem:[%s1] sm:$0xff]
    %v14 = vrcp.pop %v12
    %v15 = vmul.f32 %v12, %v14
    %v16 = vsub.f32 2.0, %v15
    %v17 = vmul.f32 %v14, %v16
    %v18 = vmul.f32 %v17, 0.4
    %v19 = vmul.f32 %v12, 0.2
    %21 = vset.pattern.permute.xlu0 0
    %22 = vperm.xlu0 %21, %v13
    %v23 = vpop.permute.xlu0 %22
    %v26 = vperm.slane %v19, 0
    %v27 = vperm.slane %v19, 1
    %v28 = vperm.slane %v19, 2
    %v32 = vmul.f32 %v23, %v26
    %v33 = vmul.f32 %v23, %v27
    %v34 = vmul.f32 %v23, %v28
    %v35 = vand.u32 2147483647, %v32
    %vm36 = vcmp.le.f32.partialorder %v35, 0.7853982
    %vm37 = vcmp.lt.s32.totalorder %v32, 0
    %v38 = vand.u32 %v32, 2139095040
    %v39 = vshrl.u32 %v38, 23
    %v40 = vsub.s32 %v39, 127
    %v41 = vand.u32 2147483647, %v32
    %v42 = vand.u32 %v41, 8388607
    %v43 = vor.u32 %v42, 8388608
    %v44 = vsub.s32 0, %v43
    %v45 = vadd.s32 %v40, 1
    %vm46 = vcmp.gt.s32.totalorder %v45, 0
    %v47 = vsel %vm46, %v45, 0
    %v48 = vshrl.u32 %v47, 5
    %v49 = vand.u32 %v47, 31
    %v50 = vsub.s32 32, %v49
    %v51 = vshrl.u32 683565275, %v50
    %v52 = vshll.u32 683565275, %v49
    %v53 = vshrl.u32 2475754826, %v50
    %v54 = vor.u32 %v52, %v53
    %v55 = vshll.u32 2475754826, %v49
    %v56 = vshrl.u32 2131351028, %v50
    %v57 = vor.u32 %v55, %v56
    %v58 = vshll.u32 2131351028, %v49
    %v59 = vshrl.u32 2102212464, %v50
    %v60 = vor.u32 %v58, %v59
    %v61 = vshll.u32 2102212464, %v49
    %v62 = vshrl.u32 920167782, %v50
    %v63 = vor.u32 %v61, %v62
    %v64 = vshll.u32 920167782, %v49
    %v65 = vshrl.u32 1326507024, %v50
    %v66 = vor.u32 %v64, %v65
    %vm67 = vcmp.lt.s32.totalorder %v48, 1
    %vm68 = vcmp.lt.s32.totalorder %v48, 2
    %vm69 = vcmp.lt.s32.totalorder %v48, 3
    %vm70 = vcmp.lt.s32.totalorder %v48, 4
    %v71 = vsel %vm67, %v51, %v54
    %v72 = vsel %vm70, %v60, 2102212464
    %v73 = vsel %vm69, %v57, %v72
    %v74 = vsel %vm68, %v71, %v73
    %v75 = vsel %vm67, %v54, %v57
    %v76 = vsel %vm70, %v63, 920167782
    %v77 = vsel %vm69, %v60, %v76
    %v78 = vsel %vm68, %v75, %v77
    %v79 = vsel %vm67, %v57, %v60
    %v80 = vsel %vm70, %v66, 1326507024
    %v81 = vsel %vm69, %v63, %v80
    %v82 = vsel %vm68, %v79, %v81
    %v83 = vshll.u32 %v43, 8
    %v84 = vand.u32 %v83, 65535
    %v85 = vshrl.u32 %v83, 16
    %v86 = vand.u32 %v82, 65535
    %v87 = vshrl.u32 %v82, 16
    %v88 = vmul.u32 %v84, %v86
    %v89 = vmul.u32 %v84, %v87
    %v90 = vmul.u32 %v85, %v86
    %v91 = vmul.u32 %v85, %v87
    %v92 = vshll.u32 %v89, 16
    %v93 = vshrl.u32 %v89, 16
    %v94 = vshll.u32 %v90, 16
    %v95 = vshrl.u32 %v90, 16
    %vm96 = vc.u32 %v88, %v92
    %v97 = vsel %vm96, 1, 0
    %v98 = vadd.s32 %v88, %v92
    %v99 = vadd.s32 %v91, %v97
    %vm100 = vc.u32 %v98, %v94
    %v101 = vsel %vm100, 1, 0
    %v102 = vadd.s32 %v98, %v94
    %v103 = vadd.s32 %v99, %v101
    %v104 = vadd.s32 %v103, %v93
    %v105 = vadd.s32 %v104, %v95
    %v106 = vand.u32 %v83, 65535
    %v107 = vshrl.u32 %v83, 16
    %v108 = vand.u32 %v78, 65535
    %v109 = vshrl.u32 %v78, 16
    %v110 = vmul.u32 %v106, %v108
    %v111 = vmul.u32 %v106, %v109
    %v112 = vmul.u32 %v107, %v108
    %v113 = vmul.u32 %v107, %v109
    %v114 = vshll.u32 %v111, 16
    %v115 = vshrl.u32 %v111, 16
    %v116 = vshll.u32 %v112, 16
    %v117 = vshrl.u32 %v112, 16
    %vm118 = vc.u32 %v110, %v114
    %v119 = vsel %vm118, 1, 0
    %v120 = vadd.s32 %v110, %v114
    %v121 = vadd.s32 %v113, %v119
    %vm122 = vc.u32 %v120, %v116
    %v123 = vsel %vm122, 1, 0
    %v124 = vadd.s32 %v120, %v116
    %v125 = vadd.s32 %v121, %v123
    %v126 = vadd.s32 %v125, %v115
    %v127 = vadd.s32 %v126, %v117
    %v128 = vmul.u32 %v83, %v74
    %v129 = vadd.s32 %v105, %v124
    %vm130 = vc.u32 %v105, %v124
    %v131 = vadd.s32 %v127, 1
    %v132 = vsel %vm130, %v131, %v127
    %v133 = vadd.s32 %v128, %v132
    %v134 = vadd.s32 %v133, 536870912
    %v135 = vshrl.u32 %v134, 30
    %v136 = vshll.u32 %v135, 30
    %v137 = vsub.s32 %v133, %v136
    %vm138 = vcmp.lt.s32.totalorder %v137, 0
    %v139 = vsub.s32 0, %v137
    %v140 = vsel %vm138, %v139, %v137
    %v141 = vclz %v140
    %v142 = vsub.s32 %v141, 2
    %vm143 = vcmp.gt.s32.totalorder 0, %v142
    %v144 = vsel %vm143, 0, %v142
    %v145 = vsub.s32 32, %v144
    %v146 = vshll.u32 %v137, %v144
    %v147 = vshrl.u32 %v129, %v145
    %v148 = vor.u32 %v146, %v147
    %v149 = vsub.s32 4294967266, %v144
    %v150 = vadd.s32 %v149, 127
    %v151 = vshll.u32 %v150, 23
    %v152 = vor.u32 4788187, %v151
    %v153 = vand.u32 2147483647, %v152
    %v155 = vcvt.s32.f32 %v148
    %v156 = vmul.f32 %v155, %v153
    %v157 = vxor.u32 %v156, 2147483648
    %v158 = vsel %vm37, %v157, %v156
    %v159 = vsub.s32 4, %v135
    %v160 = vsel %vm37, %v159, %v135
    %v161 = vsel %vm36, %v32, %v158
    %v162 = vsel %vm36, 0, %v160
    %v163 = vmul.f32 %v161, %v161
    %v164 = vmul.f32 %v163, -0.001358992
    %v165 = vadd.f32 %v164, 0.041655596
    %v166 = vmul.f32 %v163, %v165
    %v167 = vadd.f32 %v166, -0.4999988
    %v168 = vmul.f32 %v163, %v167
    %v169 = vadd.f32 1.0, %v168
    %v170 = vmul.f32 %v161, %v161
    %v171 = vmul.f32 %v170, -0.00019511016
    %v172 = vadd.f32 %v171, 0.008332121
    %v173 = vmul.f32 %v170, %v172
    %v174 = vadd.f32 %v173, -0.16666654
    %v175 = vmul.f32 %v170, %v174
    %v176 = vadd.f32 %v175, 1.0
    %v177 = vmul.f32 %v176, %v161
    %vm178 = vweird.f32 %v32
    %v179 = vadd.s32 %v162, 3
    %v180 = vand.u32 %v179, 3
    %vm181 = vcmp.lt.s32.totalorder %v180, 2
    %vm182 = vcmp.eq.s32.totalorder %v180, 0
    %v183 = vxor.u32 %v177, 2147483648
    %v184 = vsel %vm182, %v169, %v183
    %vm185 = vcmp.eq.s32.totalorder %v180, 2
    %v186 = vxor.u32 %v169, 2147483648
    %v187 = vsel %vm185, %v186, %v177
    %v188 = vsel %vm181, %v184, %v187
    %v189 = vsel %vm178, nan, %v188
    %v190 = vand.u32 2147483647, %v33
    %vm191 = vcmp.le.f32.partialorder %v190, 0.7853982
    %vm192 = vcmp.lt.s32.totalorder %v33, 0
    %v193 = vand.u32 %v33, 2139095040
    %v194 = vshrl.u32 %v193, 23
    %v195 = vsub.s32 %v194, 127
    %v196 = vand.u32 2147483647, %v33
    %v197 = vand.u32 %v196, 8388607
    %v198 = vor.u32 %v197, 8388608
    %v199 = vsub.s32 0, %v198
    %v200 = vadd.s32 %v195, 1
    %vm201 = vcmp.gt.s32.totalorder %v200, 0
    %v202 = vsel %vm201, %v200, 0
    %v203 = vshrl.u32 %v202, 5
    %v204 = vand.u32 %v202, 31
    %v205 = vsub.s32 32, %v204
    %v206 = vshrl.u32 683565275, %v205
    %v207 = vshll.u32 683565275, %v204
    %v208 = vshrl.u32 2475754826, %v205
    %v209 = vor.u32 %v207, %v208
    %v210 = vshll.u32 2475754826, %v204
    %v211 = vshrl.u32 2131351028, %v205
    %v212 = vor.u32 %v210, %v211
    %v213 = vshll.u32 2131351028, %v204
    %v214 = vshrl.u32 2102212464, %v205
    %v215 = vor.u32 %v213, %v214
    %v216 = vshll.u32 2102212464, %v204
    %v217 = vshrl.u32 920167782, %v205
    %v218 = vor.u32 %v216, %v217
    %v219 = vshll.u32 920167782, %v204
    %v220 = vshrl.u32 1326507024, %v205
    %v221 = vor.u32 %v219, %v220
    %vm222 = vcmp.lt.s32.totalorder %v203, 1
    %vm223 = vcmp.lt.s32.totalorder %v203, 2
    %vm224 = vcmp.lt.s32.totalorder %v203, 3
    %vm225 = vcmp.lt.s32.totalorder %v203, 4
    %v226 = vsel %vm222, %v206, %v209
    %v227 = vsel %vm225, %v215, 2102212464
    %v228 = vsel %vm224, %v212, %v227
    %v229 = vsel %vm223, %v226, %v228
    %v230 = vsel %vm222, %v209, %v212
    %v231 = vsel %vm225, %v218, 920167782
    %v232 = vsel %vm224, %v215, %v231
    %v233 = vsel %vm223, %v230, %v232
    %v234 = vsel %vm222, %v212, %v215
    %v235 = vsel %vm225, %v221, 1326507024
    %v236 = vsel %vm224, %v218, %v235
    %v237 = vsel %vm223, %v234, %v236
    %v238 = vshll.u32 %v198, 8
    %v239 = vand.u32 %v238, 65535
    %v240 = vshrl.u32 %v238, 16
    %v241 = vand.u32 %v237, 65535
    %v242 = vshrl.u32 %v237, 16
    %v243 = vmul.u32 %v239, %v241
    %v244 = vmul.u32 %v239, %v242
    %v245 = vmul.u32 %v240, %v241
    %v246 = vmul.u32 %v240, %v242
    %v247 = vshll.u32 %v244, 16
    %v248 = vshrl.u32 %v244, 16
    %v249 = vshll.u32 %v245, 16
    %v250 = vshrl.u32 %v245, 16
    %vm251 = vc.u32 %v243, %v247
    %v252 = vsel %vm251, 1, 0
    %v253 = vadd.s32 %v243, %v247
    %v254 = vadd.s32 %v246, %v252
    %vm255 = vc.u32 %v253, %v249
    %v256 = vsel %vm255, 1, 0
    %v257 = vadd.s32 %v253, %v249
    %v258 = vadd.s32 %v254, %v256
    %v259 = vadd.s32 %v258, %v248
    %v260 = vadd.s32 %v259, %v250
    %v261 = vand.u32 %v238, 65535
    %v262 = vshrl.u32 %v238, 16
    %v263 = vand.u32 %v233, 65535
    %v264 = vshrl.u32 %v233, 16
    %v265 = vmul.u32 %v261, %v263
    %v266 = vmul.u32 %v261, %v264
    %v267 = vmul.u32 %v262, %v263
    %v268 = vmul.u32 %v262, %v264
    %v269 = vshll.u32 %v266, 16
    %v270 = vshrl.u32 %v266, 16
    %v271 = vshll.u32 %v267, 16
    %v272 = vshrl.u32 %v267, 16
    %vm273 = vc.u32 %v265, %v269
    %v274 = vsel %vm273, 1, 0
    %v275 = vadd.s32 %v265, %v269
    %v276 = vadd.s32 %v268, %v274
    %vm277 = vc.u32 %v275, %v271
    %v278 = vsel %vm277, 1, 0
    %v279 = vadd.s32 %v275, %v271
    %v280 = vadd.s32 %v276, %v278
    %v281 = vadd.s32 %v280, %v270
    %v282 = vadd.s32 %v281, %v272
    %v283 = vmul.u32 %v238, %v229
    %v284 = vadd.s32 %v260, %v279
    %vm285 = vc.u32 %v260, %v279
    %v286 = vadd.s32 %v282, 1
    %v287 = vsel %vm285, %v286, %v282
    %v288 = vadd.s32 %v283, %v287
    %v289 = vadd.s32 %v288, 536870912
    %v290 = vshrl.u32 %v289, 30
    %v291 = vshll.u32 %v290, 30
    %v292 = vsub.s32 %v288, %v291
    %vm293 = vcmp.lt.s32.totalorder %v292, 0
    %v294 = vsub.s32 0, %v292
    %v295 = vsel %vm293, %v294, %v292
    %v296 = vclz %v295
    %v297 = vsub.s32 %v296, 2
    %vm298 = vcmp.gt.s32.totalorder 0, %v297
    %v299 = vsel %vm298, 0, %v297
    %v300 = vsub.s32 32, %v299
    %v301 = vshll.u32 %v292, %v299
    %v302 = vshrl.u32 %v284, %v300
    %v303 = vor.u32 %v301, %v302
    %v304 = vsub.s32 4294967266, %v299
    %v305 = vadd.s32 %v304, 127
    %v306 = vshll.u32 %v305, 23
    %v307 = vor.u32 4788187, %v306
    %v308 = vand.u32 2147483647, %v307
    %v310 = vcvt.s32.f32 %v303
    %v311 = vmul.f32 %v310, %v308
    %v312 = vxor.u32 %v311, 2147483648
    %v313 = vsel %vm192, %v312, %v311
    %v314 = vsub.s32 4, %v290
    %v315 = vsel %vm192, %v314, %v290
    %v316 = vsel %vm191, %v33, %v313
    %v317 = vsel %vm191, 0, %v315
    %v318 = vmul.f32 %v316, %v316
    %v319 = vmul.f32 %v318, -0.001358992
    %v320 = vadd.f32 %v319, 0.041655596
    %v321 = vmul.f32 %v318, %v320
    %v322 = vadd.f32 %v321, -0.4999988
    %v323 = vmul.f32 %v318, %v322
    %v324 = vadd.f32 1.0, %v323
    %v325 = vmul.f32 %v316, %v316
    %v326 = vmul.f32 %v325, -0.00019511016
    %v327 = vadd.f32 %v326, 0.008332121
    %v328 = vmul.f32 %v325, %v327
    %v329 = vadd.f32 %v328, -0.16666654
    %v330 = vmul.f32 %v325, %v329
    %v331 = vadd.f32 %v330, 1.0
    %v332 = vmul.f32 %v331, %v316
    %vm333 = vweird.f32 %v33
    %v334 = vadd.s32 %v317, 3
    %v335 = vand.u32 %v334, 3
    %vm336 = vcmp.lt.s32.totalorder %v335, 2
    %vm337 = vcmp.eq.s32.totalorder %v335, 0
    %v338 = vxor.u32 %v332, 2147483648
    %v339 = vsel %vm337, %v324, %v338
    %vm340 = vcmp.eq.s32.totalorder %v335, 2
    %v341 = vxor.u32 %v324, 2147483648
    %v342 = vsel %vm340, %v341, %v332
    %v343 = vsel %vm336, %v339, %v342
    %v344 = vsel %vm333, nan, %v343
    %v345 = vand.u32 2147483647, %v34
    %vm346 = vcmp.le.f32.partialorder %v345, 0.7853982
    %vm347 = vcmp.lt.s32.totalorder %v34, 0
    %v348 = vand.u32 %v34, 2139095040
    %v349 = vshrl.u32 %v348, 23
    %v350 = vsub.s32 %v349, 127
    %v351 = vand.u32 2147483647, %v34
    %v352 = vand.u32 %v351, 8388607
    %v353 = vor.u32 %v352, 8388608
    %v354 = vsub.s32 0, %v353
    %v355 = vadd.s32 %v350, 1
    %vm356 = vcmp.gt.s32.totalorder %v355, 0
    %v357 = vsel %vm356, %v355, 0
    %v358 = vshrl.u32 %v357, 5
    %v359 = vand.u32 %v357, 31
    %v360 = vsub.s32 32, %v359
    %v361 = vshrl.u32 683565275, %v360
    %v362 = vshll.u32 683565275, %v359
    %v363 = vshrl.u32 2475754826, %v360
    %v364 = vor.u32 %v362, %v363
    %v365 = vshll.u32 2475754826, %v359
    %v366 = vshrl.u32 2131351028, %v360
    %v367 = vor.u32 %v365, %v366
    %v368 = vshll.u32 2131351028, %v359
    %v369 = vshrl.u32 2102212464, %v360
    %v370 = vor.u32 %v368, %v369
    %v371 = vshll.u32 2102212464, %v359
    %v372 = vshrl.u32 920167782, %v360
    %v373 = vor.u32 %v371, %v372
    %v374 = vshll.u32 920167782, %v359
    %v375 = vshrl.u32 1326507024, %v360
    %v376 = vor.u32 %v374, %v375
    %vm377 = vcmp.lt.s32.totalorder %v358, 1
    %vm378 = vcmp.lt.s32.totalorder %v358, 2
    %vm379 = vcmp.lt.s32.totalorder %v358, 3
    %vm380 = vcmp.lt.s32.totalorder %v358, 4
    %v381 = vsel %vm377, %v361, %v364
    %v382 = vsel %vm380, %v370, 2102212464
    %v383 = vsel %vm379, %v367, %v382
    %v384 = vsel %vm378, %v381, %v383
    %v385 = vsel %vm377, %v364, %v367
    %v386 = vsel %vm380, %v373, 920167782
    %v387 = vsel %vm379, %v370, %v386
    %v388 = vsel %vm378, %v385, %v387
    %v389 = vsel %vm377, %v367, %v370
    %v390 = vsel %vm380, %v376, 1326507024
    %v391 = vsel %vm379, %v373, %v390
    %v392 = vsel %vm378, %v389, %v391
    %v393 = vshll.u32 %v353, 8
    %v394 = vand.u32 %v393, 65535
    %v395 = vshrl.u32 %v393, 16
    %v396 = vand.u32 %v392, 65535
    %v397 = vshrl.u32 %v392, 16
    %v398 = vmul.u32 %v394, %v396
    %v399 = vmul.u32 %v394, %v397
    %v400 = vmul.u32 %v395, %v396
    %v401 = vmul.u32 %v395, %v397
    %v402 = vshll.u32 %v399, 16
    %v403 = vshrl.u32 %v399, 16
    %v404 = vshll.u32 %v400, 16
    %v405 = vshrl.u32 %v400, 16
    %vm406 = vc.u32 %v398, %v402
    %v407 = vsel %vm406, 1, 0
    %v408 = vadd.s32 %v398, %v402
    %v409 = vadd.s32 %v401, %v407
    %vm410 = vc.u32 %v408, %v404
    %v411 = vsel %vm410, 1, 0
    %v412 = vadd.s32 %v408, %v404
    %v413 = vadd.s32 %v409, %v411
    %v414 = vadd.s32 %v413, %v403
    %v415 = vadd.s32 %v414, %v405
    %v416 = vand.u32 %v393, 65535
    %v417 = vshrl.u32 %v393, 16
    %v418 = vand.u32 %v388, 65535
    %v419 = vshrl.u32 %v388, 16
    %v420 = vmul.u32 %v416, %v418
    %v421 = vmul.u32 %v416, %v419
    %v422 = vmul.u32 %v417, %v418
    %v423 = vmul.u32 %v417, %v419
    %v424 = vshll.u32 %v421, 16
    %v425 = vshrl.u32 %v421, 16
    %v426 = vshll.u32 %v422, 16
    %v427 = vshrl.u32 %v422, 16
    %vm428 = vc.u32 %v420, %v424
    %v429 = vsel %vm428, 1, 0
    %v430 = vadd.s32 %v420, %v424
    %v431 = vadd.s32 %v423, %v429
    %vm432 = vc.u32 %v430, %v426
    %v433 = vsel %vm432, 1, 0
    %v434 = vadd.s32 %v430, %v426
    %v435 = vadd.s32 %v431, %v433
    %v436 = vadd.s32 %v435, %v425
    %v437 = vadd.s32 %v436, %v427
    %v438 = vmul.u32 %v393, %v384
    %v439 = vadd.s32 %v415, %v434
    %vm440 = vc.u32 %v415, %v434
    %v441 = vadd.s32 %v437, 1
    %v442 = vsel %vm440, %v441, %v437
    %v443 = vadd.s32 %v438, %v442
    %v444 = vadd.s32 %v443, 536870912
    %v445 = vshrl.u32 %v444, 30
    %v446 = vshll.u32 %v445, 30
    %v447 = vsub.s32 %v443, %v446
    %vm448 = vcmp.lt.s32.totalorder %v447, 0
    %v449 = vsub.s32 0, %v447
    %v450 = vsel %vm448, %v449, %v447
    %v451 = vclz %v450
    %v452 = vsub.s32 %v451, 2
    %vm453 = vcmp.gt.s32.totalorder 0, %v452
    %v454 = vsel %vm453, 0, %v452
    %v455 = vsub.s32 32, %v454
    %v456 = vshll.u32 %v447, %v454
    %v457 = vshrl.u32 %v439, %v455
    %v458 = vor.u32 %v456, %v457
    %v459 = vsub.s32 4294967266, %v454
    %v460 = vadd.s32 %v459, 127
    %v461 = vshll.u32 %v460, 23
    %v462 = vor.u32 4788187, %v461
    %v463 = vand.u32 2147483647, %v462
    %v465 = vcvt.s32.f32 %v458
    %v466 = vmul.f32 %v465, %v463
    %v467 = vxor.u32 %v466, 2147483648
    %v468 = vsel %vm347, %v467, %v466
    %v469 = vsub.s32 4, %v445
    %v470 = vsel %vm347, %v469, %v445
    %v471 = vsel %vm346, %v34, %v468
    %v472 = vsel %vm346, 0, %v470
    %v473 = vmul.f32 %v471, %v471
    %v474 = vmul.f32 %v473, -0.001358992
    %v475 = vadd.f32 %v474, 0.041655596
    %v476 = vmul.f32 %v473, %v475
    %v477 = vadd.f32 %v476, -0.4999988
    %v478 = vmul.f32 %v473, %v477
    %v479 = vadd.f32 1.0, %v478
    %v480 = vmul.f32 %v471, %v471
    %v481 = vmul.f32 %v480, -0.00019511016
    %v482 = vadd.f32 %v481, 0.008332121
    %v483 = vmul.f32 %v480, %v482
    %v484 = vadd.f32 %v483, -0.16666654
    %v485 = vmul.f32 %v480, %v484
    %v486 = vadd.f32 %v485, 1.0
    %v487 = vmul.f32 %v486, %v471
    %vm488 = vweird.f32 %v34
    %v489 = vadd.s32 %v472, 3
    %v490 = vand.u32 %v489, 3
    %vm491 = vcmp.lt.s32.totalorder %v490, 2
    %vm492 = vcmp.eq.s32.totalorder %v490, 0
    %v493 = vxor.u32 %v487, 2147483648
    %v494 = vsel %vm492, %v479, %v493
    %vm495 = vcmp.eq.s32.totalorder %v490, 2
    %v496 = vxor.u32 %v479, 2147483648
    %v497 = vsel %vm495, %v496, %v487
    %v498 = vsel %vm491, %v494, %v497
    %v499 = vsel %vm488, nan, %v498
    %v501 = vperm.slane %v18, 0
    %v502 = vperm.slane %v18, 1
    %v503 = vperm.slane %v18, 2
    %v507 = vmul.f32 %v189, %v501
    %v508 = vmul.f32 %v344, %v502
    %v509 = vmul.f32 %v499, %v503
    %510 = vst [vmem:[#allocation2] sm:$0xff] %v507
    %511 = vst [vmem:[#allocation2 + $0x8] sm:$0xff] %v508
    %512 = vst [vmem:[#allocation2 + $0x10] sm:$0xff] %v509
    // Predicated region
    $region10: #{tpu_custom_call.1} parent=1 // pred_check
      _
    $region11: #{tpu_custom_call.1} parent=1 // pred_check_branch
      %514 = sbr.rel (0) target = $region13
    $region12: #{tpu_custom_call.1} parent=1 // pred_region
      %516 = vsyncadd [#allocation3], 0
      %s518 = sshll.u32 [#allocation2], 4
      %s519 = int_to_ptr.vmem [resolvable:$true] %s518
      %s520 = sshll.u32 %s2, 4
      %s521 = int_to_ptr.hbm [resolvable:$true] %s520
      %523 = dma.vmem_to_hbm [thread:$0]  %s519, 384, %s521, [#allocation3]
    $region13: #{tpu_custom_call.1} parent=1 // pred_fallthru
      _
    // Predicated region
    $region14: #{tpu_custom_call.1} parent=1 // pred_check
      _
    $region15: #{tpu_custom_call.1} parent=1 // pred_check_branch
      %525 = sbr.rel (0) target = $region17
    $region16: #{tpu_custom_call.1} parent=1 // pred_region
      %527 = dma.done [#allocation3], 384
    $region17: #{tpu_custom_call.1} parent=1 // pred_fallthru
      _
    %528 = vsyncpa [#allocation3], 1

</llo_original>
